<compile_context>
chip_gen: v5e
topology: v5e:2x2
jax: 0.10.0
libtpu: 0.0.40
codegen_flags: <defaults>
</compile_context>

<pallas_src>
import jax
import jax.numpy as jnp
from jax.experimental import pallas as pl
from jax.experimental.pallas import tpu as pltpu

LANES = 128          # vreg lane width
SUBLANES = 8         # f32 sublane tiling


def _linear_kernel(params_ref, x_ref, o_ref):
    """One lane-dense batch tile of nn.Linear(2, 1).

    params_ref: (2, 128) f32 VMEM, grid-resident:
        row 0 = [w0, w1, w0, w1, ...]  (lane-interleaved weight pattern)
        row 1 = [b,  b,  b,  ...]      (bias broadcast)
    x_ref: (tile_rows, 128) VMEM -- row-major view of x (B, 2):
        lane 2k   of row r = x[64*r + k, 0]
        lane 2k+1 of row r = x[64*r + k, 1]
    o_ref: (tile_rows, 128) VMEM -- even lanes receive y[64*r + k];
        odd lanes are scratch that the wrapper strips.
    """
    prod = x_ref[...].astype(jnp.float32) * params_ref[0:1, :]
    # Pairwise lane sum: roll by 127 (== -1 mod 128, jnp.roll semantics) brings
    # lane 2k+1 into lane 2k, so even lanes get x0*w0 + x1*w1.  XLU slot only,
    # free under a memory-bound regime; no MXU involved.
    pair = prod + pltpu.roll(prod, shift=LANES - 1, axis=1)
    o_ref[...] = (pair + params_ref[1:2, :]).astype(o_ref.dtype)


def linear_forward(x, weight, bias, *, tile_rows=4096):
    """Forward of nn.Linear(2, 1): y = x @ W.T + b.

    x:      (B, 2) float32
    weight: (1, 2) float32  (PyTorch layout)
    bias:   (1,)   float32
    returns (B, 1) float32
    """
    B, in_f = x.shape
    out_f, in_f_w = weight.shape
    assert in_f == 2 and in_f_w == 2 and out_f == 1, "specialised for nn.Linear(2, 1)"
    assert tile_rows > 0 and tile_rows % SUBLANES == 0

    # Copy-free view: row-major flatten of (B, 2); each 128-lane row holds 64
    # interleaved (x0, x1) pairs.  Only the ragged tail (< 8*128 elements) is
    # padded, so there is no full-array pad/transpose pass over x.
    flat = x.reshape(-1)
    total = flat.shape[0]                        # 2 * B
    chunk = SUBLANES * LANES                     # 1024: keeps rows % 8 == 0
    padded = pl.cdiv(total, chunk) * chunk
    if padded != total:
        flat = jnp.pad(flat, (0, padded - total))
    rows = padded // LANES
    xr = flat.reshape(rows, LANES)

    tr = min(tile_rows, rows)                    # clamp for small batches
    grid = (pl.cdiv(rows, tr),)                  # ragged last block: Pallas masks edge writes

    # Grid-resident parameters (1 KiB): interleaved weight pattern + bias row.
    w_pat = jnp.tile(weight.astype(jnp.float32).reshape(-1), LANES // 2)      # (128,)
    b_row = jnp.broadcast_to(bias.astype(jnp.float32).reshape(1), (LANES,))   # (128,)
    params = jnp.stack([w_pat, b_row], axis=0)                                # (2, 128)

    out = pl.pallas_call(
        _linear_kernel,
        out_shape=jax.ShapeDtypeStruct((rows, LANES), x.dtype),
        grid_spec=pltpu.PrefetchScalarGridSpec(
            num_scalar_prefetch=0,
            grid=grid,
            in_specs=[
                # Constant index_map -> parameter block stays resident in VMEM.
                pl.BlockSpec((2, LANES), lambda i: (0, 0)),
                # x slab: batch runs along sublanes and lanes, fully lane-dense.
                pl.BlockSpec((tr, LANES), lambda i: (i, 0)),
            ],
            out_specs=pl.BlockSpec((tr, LANES), lambda i: (i, 0)),
        ),
        compiler_params=pltpu.CompilerParams(
            # Independent batch tiles: lets v7x shard them over its 2 TCs.
            dimension_semantics=("parallel",),
            # v5e's default scoped-VMEM limit is 16 MiB; be explicit so large
            # tiles keep working there (usage ~8 MiB double-buffered).
            vmem_limit_bytes=32 * 1024 * 1024,
        ),
    )(params, xr)

    # Even lanes hold y; strip the odd (scratch) lanes and the padded tail.
    return out.reshape(rows * (LANES // 2), 2)[:B, 0:1]


if __name__ == "__main__":
    key = jax.random.PRNGKey(0)

    # Small shapes consistent with nn.Linear(2, 1).
    B, IN, OUT = 8, 2, 1
    x = jax.random.normal(key, (B, IN), dtype=jnp.float32)

    # Deterministic parameters (PyTorch-style shapes: W (1, 2), b (1,)).
    weight = jnp.array([[0.3, -0.7]], dtype=jnp.float32)   # (OUT, IN)
    bias = jnp.array([0.1], dtype=jnp.float32)             # (OUT,)

    out = jax.block_until_ready(linear_forward(x, weight, bias))
    ref = x @ weight.T + bias
    assert out.shape == (B, OUT)
    assert jnp.allclose(out, ref, atol=1e-5, rtol=1e-5)

    # Secondary check: B not a multiple of 64 (exercises tail pad) and a small
    # tile so the grid has several blocks with a ragged final block (exercises
    # Pallas edge masking on the un-padded grid).
    B2 = 150000
    x2 = jax.random.normal(jax.random.PRNGKey(1), (B2, IN), dtype=jnp.float32)
    out2 = jax.block_until_ready(linear_forward(x2, weight, bias, tile_rows=512))
    ref2 = x2 @ weight.T + bias
    assert out2.shape == (B2, OUT)
    assert jnp.allclose(out2, ref2, atol=1e-5, rtol=1e-5)

    print("KERNEL_OK")
</pallas_src>

<mosaic_0001>
module attributes {stable_mosaic.version = 11 : i64} {
  func.func @_linear_kernel(%arg0: i32, %arg1: memref<2x128xf32, #tpu.memory_space<vmem>>, %arg2: memref<8x128xf32, #tpu.memory_space<vmem>>, %arg3: memref<8x128xf32, #tpu.memory_space<vmem>>) attributes {dimension_semantics = [#tpu.dimension_semantics<parallel>], iteration_bounds = array<i64: 1>, scalar_prefetch = 0 : i64, scratch_operands = 0 : i64, tpu.core_type = #tpu.core_type<tc>, window_params = [{pipeline_mode = #tpu.pipeline_mode<synchronous>, transform_indices = @transform_0, window_bounds = array<i64: 2, 128>}, {transform_indices = @transform_1, window_bounds = array<i64: 8, 128>}, {transform_indices = @transform_2, window_bounds = array<i64: 8, 128>}]} {
    %c0 = arith.constant 0 : index
    %c0_0 = arith.constant 0 : index
    %0 = vector.load %arg2[%c0, %c0_0] : memref<8x128xf32, #tpu.memory_space<vmem>>, vector<8x128xf32>
    %c0_1 = arith.constant 0 : index
    %c0_2 = arith.constant 0 : index
    %1 = vector.load %arg1[%c0_1, %c0_2] : memref<2x128xf32, #tpu.memory_space<vmem>>, vector<1x128xf32>
    %2 = vector.broadcast %1 : vector<1x128xf32> to vector<8x128xf32>
    %3 = arith.mulf %0, %2 : vector<8x128xf32>
    %c127_i32 = arith.constant 127 : i32
    %4 = tpu.dynamic_rotate %3 by %c127_i32 dim 1 : vector<8x128xf32>, i32 -> vector<8x128xf32>
    %5 = arith.addf %3, %4 : vector<8x128xf32>
    %c1 = arith.constant 1 : index
    %c0_3 = arith.constant 0 : index
    %6 = vector.load %arg1[%c1, %c0_3] : memref<2x128xf32, #tpu.memory_space<vmem>>, vector<1x128xf32>
    %7 = vector.broadcast %6 : vector<1x128xf32> to vector<8x128xf32>
    %8 = arith.addf %5, %7 : vector<8x128xf32>
    %c0_4 = arith.constant 0 : index
    %c0_5 = arith.constant 0 : index
    %9 = vector.load %arg3[%c0_4, %c0_5] : memref<8x128xf32, #tpu.memory_space<vmem>>, vector<8x128xf32>
    tpu.vector_store %arg3[%c0_4, %c0_5], %8 {strides = array<i32>} : memref<8x128xf32, #tpu.memory_space<vmem>>, vector<8x128xf32>,
    return
  }
  func.func @transform_0(%arg0: i32) -> (i32, i32) {
    %c0_i32 = arith.constant 0 : i32
    %c0_i32_0 = arith.constant 0 : i32
    %c0_i32_1 = arith.constant 0 : i32
    return %c0_i32, %c0_i32_0 : i32, i32
  }
  func.func @transform_1(%arg0: i32) -> (i32, i32) {
    %c0_i32 = arith.constant 0 : i32
    %c0_i32_0 = arith.constant 0 : i32
    return %arg0, %c0_i32 : i32, i32
  }
  func.func @transform_2(%arg0: i32) -> (i32, i32) {
    %c0_i32 = arith.constant 0 : i32
    %c0_i32_0 = arith.constant 0 : i32
    return %arg0, %c0_i32 : i32, i32
  }
}

</mosaic_0001>

<llo_original>
// kernel: tpu_custom_call.1
$region0: #{tpu_custom_call.1}
  #allocation0 [shape = 'u32[]', space=smem, size = 0x4, offset = 0x4, fixed_abs, tag = 'smem constant byte address 0x4 - core index']
  #allocation1 [shape = 'u32[72,128]{1,0:T(1,128)}', space=vmem, size = 0x9000, scoped, tag = 'internal scratch']
  %s0 = inlined_call_operand.hbm [shape: f32[2,128], index: 0, kind: input, shape index: {}]
  %s1 = inlined_call_operand.hbm [shape: f32[8,128], index: 1, kind: input, shape index: {}]
  %s2 = inlined_call_operand.hbm [shape: f32[8,128], index: 2, kind: output, shape index: {}]
  %s3 = sld [smem:[#allocation0]]
  $region26: #{tpu_custom_call.1} parent=0
    _
  %s5 = ssub.s32 1, %s3
  %s6 = scalar_select 0, %s5, %s3
  $region1: #{tpu_custom_call.1} parent=0
    #allocation2 [shape = 'u8[1024]{0}', space=vmem, size = 0x400, scoped, tag = 'input window, operand 0, single buffered']
    #allocation3 [shape = 's32[1]{0}', space=sflag, size = 0x4, scoped, tag = 'scoped memory for tpu_custom_call.1']
    #allocation4 [shape = 's32[1]{0}', space=sflag, size = 0x4, scoped, tag = 'scoped memory for tpu_custom_call.1']
    #allocation5 [shape = 'u8[4096]{0}', space=vmem, size = 0x1000, scoped, tag = 'input window, operand 1, single buffered']
    #allocation6 [shape = 's32[1]{0}', space=sflag, size = 0x4, scoped, tag = 'scoped memory for tpu_custom_call.1']
    #allocation7 [shape = 'u8[4096]{0}', space=vmem, size = 0x1000, scoped, tag = 'output window, operand 0, single buffered']
    %7 = vsyncpa [#allocation3], 0
    %8 = vsyncpa [#allocation6], 0
    %9 = vsyncpa [#allocation4], 0
    // Predicated region
    $region2: #{tpu_custom_call.1} parent=1 // pred_check
      _
    $region3: #{tpu_custom_call.1} parent=1 // pred_check_branch
      %11 = sbr.rel (0) target = $region5
    $region4: #{tpu_custom_call.1} parent=1 // pred_region
      %13 = vsyncadd [#allocation3], 0
      %s15 = sshll.u32 %s0, 4
      %s16 = int_to_ptr.hbm [resolvable:$true] %s15
      %s17 = sshll.u32 [#allocation2], 4
      %s18 = int_to_ptr.vmem [resolvable:$true] %s17
      %20 = dma.hbm_to_vmem [thread:$0]  %s16, 32, %s18, [#allocation3]
    $region5: #{tpu_custom_call.1} parent=1 // pred_fallthru
      _
    // Predicated region
    $region6: #{tpu_custom_call.1} parent=1 // pred_check
      _
    $region7: #{tpu_custom_call.1} parent=1 // pred_check_branch
      %22 = sbr.rel (0) target = $region9
    $region8: #{tpu_custom_call.1} parent=1 // pred_region
      %24 = vsyncadd [#allocation6], 0
      %s26 = sshll.u32 %s1, 4
      %s27 = int_to_ptr.hbm [resolvable:$true] %s26
      %s28 = sshll.u32 [#allocation5], 4
      %s29 = int_to_ptr.vmem [resolvable:$true] %s28
      %31 = dma.hbm_to_vmem [thread:$0]  %s27, 128, %s29, [#allocation6]
    $region9: #{tpu_custom_call.1} parent=1 // pred_fallthru
      _
    // Predicated region
    $region10: #{tpu_custom_call.1} parent=1 // pred_check
      _
    $region11: #{tpu_custom_call.1} parent=1 // pred_check_branch
      %33 = sbr.rel (0) target = $region13
    $region12: #{tpu_custom_call.1} parent=1 // pred_region
      %35 = dma.done [#allocation3], 32
    $region13: #{tpu_custom_call.1} parent=1 // pred_fallthru
      _
    // Predicated region
    $region14: #{tpu_custom_call.1} parent=1 // pred_check
      _
    $region15: #{tpu_custom_call.1} parent=1 // pred_check_branch
      %37 = sbr.rel (0) target = $region17
    $region16: #{tpu_custom_call.1} parent=1 // pred_region
      %39 = dma.done [#allocation6], 128
    $region17: #{tpu_custom_call.1} parent=1 // pred_fallthru
      _
    %v40 = vld [vmem:[#allocation5] sm:$0xff]
    %v41 = vld [vmem:[#allocation2] sm:$0x1]
    %v42 = vperm.slane %v41, 0
    %v43 = vmul.f32 %v40, %v42
    %44 = vrot.lane.b32.xlu0 %v43, 127
    %v45 = vpop.permute.xlu0 %44
    %v46 = vadd.f32 %v43, %v45
    %v47 = vld [vmem:[#allocation2 + $0x1] sm:$0x1]
    %v48 = vperm.slane %v47, 0
    %v49 = vadd.f32 %v46, %v48
    %50 = vst [vmem:[#allocation7] sm:$0xff] %v49
    // Predicated region
    $region18: #{tpu_custom_call.1} parent=1 // pred_check
      _
    $region19: #{tpu_custom_call.1} parent=1 // pred_check_branch
      %52 = sbr.rel (0) target = $region21
    $region20: #{tpu_custom_call.1} parent=1 // pred_region
      %54 = vsyncadd [#allocation4], 0
      %s56 = sshll.u32 [#allocation7], 4
      %s57 = int_to_ptr.vmem [resolvable:$true] %s56
      %s58 = sshll.u32 %s2, 4
      %s59 = int_to_ptr.hbm [resolvable:$true] %s58
      %61 = dma.vmem_to_hbm [thread:$0]  %s57, 128, %s59, [#allocation4]
    $region21: #{tpu_custom_call.1} parent=1 // pred_fallthru
      _
    // Predicated region
    $region22: #{tpu_custom_call.1} parent=1 // pred_check
      _
    $region23: #{tpu_custom_call.1} parent=1 // pred_check_branch
      %63 = sbr.rel (0) target = $region25
    $region24: #{tpu_custom_call.1} parent=1 // pred_region
      %65 = dma.done [#allocation4], 128
    $region25: #{tpu_custom_call.1} parent=1 // pred_fallthru
      _
    %66 = vsyncpa [#allocation3], 1
    %67 = vsyncpa [#allocation6], 1
    %68 = vsyncpa [#allocation4], 1

</llo_original>
